<compile_context>
chip_gen: v6e
topology: v6e:2x2x1
jax: 0.10.0
libtpu: 0.0.40
codegen_flags: <defaults>
</compile_context>

<pallas_src>
import jax
import jax.numpy as jnp
from jax.experimental import pallas as pl
from jax.experimental.pallas import tpu as pltpu


def _make_outconv_kernel(C_in, C_out, H, W):
    K = 3
    HW = H * W
    PAD = W + 1  # lane pad on each side of the flat (h*W + w) axis

    def kernel(x_ref, w_ref, b_ref, o_ref):
        # x_ref: (1, C_in, HW + 2*PAD)  lane-padded flat image for this n
        # w_ref: (C_out, 9*C_in)        GEMM-layout equivalent-conv weights
        # b_ref: (C_out, 1)             bias (lane broadcast)
        # o_ref: (1, C_out, HW)         lane-dense output
        x = x_ref[0]                                      # (C_in, HW + 2*PAD)

        # Pixel column index w of every output lane (p = h*W + w -> p % W = w).
        ww = jax.lax.broadcasted_iota(jnp.int32, (C_in, HW), 1) % W

        # In-kernel im2col: each 3x3 tap (dh, dw) is a static lane-offset
        # slice of the padded flat image.  For output pixel p the slice reads
        # x_flat[p + dh*W + dw]; h out-of-range lands in the zero pad, only
        # the w row-wrap needs masking.
        taps = []
        for kh in range(K):
            dh = kh - 1
            for kw in range(K):
                dw = kw - 1
                start = PAD + dh * W + dw                 # in [0, 2*W + 2]
                t = x[:, start:start + HW]                # (C_in, HW)
                if dw == -1:
                    t = jnp.where(ww >= 1, t, 0.0)
                elif dw == 1:
                    t = jnp.where(ww <= W - 2, t, 0.0)
                taps.append(t)

        # Stage all 9 taps and issue a single K = 9*C_in MXU contraction
        # (not 9 shallow K=C_in dots).
        x_col = jnp.concatenate(taps, axis=0)             # (9*C_in, HW)
        acc = jnp.dot(w_ref[...], x_col,
                      preferred_element_type=jnp.float32)  # (C_out, HW)
        acc = acc + b_ref[...]                             # lane broadcast

        # Sigmoid: exp + approximate reciprocal, both on the EUP slot.
        y = pl.reciprocal(1.0 + jnp.exp(-acc), approx=True)
        o_ref[0] = y.astype(o_ref.dtype)

    return kernel


def prepare_outconv_params(wt, bias):
    """One-time weight glue, hoisted out of the per-call forward path.

    ConvTranspose2d(stride=1, padding=1, k=3) == direct conv(padding=1) with
    w_eq[kh, kw, ci, co] = wt[ci, co, 2-kh, 2-kw].

    Returns:
      w_mat: (C_out, 9*C_in), rows ordered (kh, kw, ci) to match the kernel's
             tap staging order.
      b_col: (C_out, 1).
    """
    C_in, C_out, K, _ = wt.shape
    w_eq = jnp.transpose(wt[:, :, ::-1, ::-1], (2, 3, 0, 1))   # (K, K, Cin, Cout)
    w_mat = w_eq.reshape(K * K * C_in, C_out).T                # (Cout, 9*Cin)
    b_col = bias.reshape(C_out, 1)
    return w_mat, b_col


def outconv_forward(x_nchw, w_mat, b_col):
    """ConvTranspose2d(k=3, s=1, p=1) + Sigmoid.

    x_nchw: (N, C_in, H, W) f32
    w_mat:  (C_out, 9*C_in)  from prepare_outconv_params
    b_col:  (C_out, 1)
    returns (N, C_out, H, W) f32
    """
    N, C_in, H, W = x_nchw.shape
    C_out = w_mat.shape[0]
    K = 3
    HW = H * W
    PAD = W + 1
    LP = HW + 2 * PAD

    # The ONLY per-call data prep: free row-major reshape + one small lane pad
    # (~1.13x, vs. the previous 9x im2col expansion + stack + transpose).
    x_flat = x_nchw.reshape(N, C_in, HW)
    x_lp = jnp.pad(x_flat, ((0, 0), (0, 0), (PAD, PAD)))        # (N, Cin, LP)

    kernel = _make_outconv_kernel(C_in, C_out, H, W)

    cost = pl.CostEstimate(
        flops=2 * N * HW * C_out * (K * K * C_in),
        transcendentals=2 * N * HW * C_out,                      # exp + rcp
        bytes_accessed=4 * (N * C_in * LP + C_out * K * K * C_in
                            + C_out + N * C_out * HW),
    )

    out_flat = pl.pallas_call(
        kernel,
        out_shape=jax.ShapeDtypeStruct((N, C_out, HW), jnp.float32),
        grid_spec=pltpu.PrefetchScalarGridSpec(
            num_scalar_prefetch=0,
            grid=(N,),                       # one image per step
            in_specs=[
                pl.BlockSpec((1, C_in, LP), lambda n: (n, 0, 0)),
                pl.BlockSpec((C_out, K * K * C_in), lambda n: (0, 0)),
                pl.BlockSpec((C_out, 1), lambda n: (0, 0)),
            ],
            out_specs=pl.BlockSpec((1, C_out, HW), lambda n: (n, 0, 0)),
        ),
        compiler_params=pltpu.CompilerParams(
            dimension_semantics=("parallel",)),  # both TCs on v7x
        cost_estimate=cost,
    )(x_lp, w_mat, b_col)

    # Free row-major reshape back to NCHW (no transpose, no extra HBM pass).
    return out_flat.reshape(N, C_out, H, W)


if __name__ == "__main__":
    key = jax.random.PRNGKey(0)
    k_x, k_w, k_b = jax.random.split(key, 3)

    N, C_in, C_out, H, W = 2, 4, 3, 16, 16

    x = jax.random.normal(k_x, (N, C_in, H, W), dtype=jnp.float32)
    # Deterministic synthetic params (shapes follow nn.ConvTranspose2d):
    # weight: (in_channels, out_channels, 3, 3), bias: (out_channels,)
    fan = C_in * 3 * 3
    bound = float(1.0 / (fan ** 0.5))
    wt = jax.random.uniform(k_w, (C_in, C_out, 3, 3), jnp.float32, -bound, bound)
    bias = jax.random.uniform(k_b, (C_out,), jnp.float32, -bound, bound)

    # One-time parameter prep (hoisted out of the forward path).
    w_mat, b_col = jax.block_until_ready(prepare_outconv_params(wt, bias))

    fwd = jax.jit(outconv_forward)
    out = fwd(x, w_mat, b_col)
    jax.block_until_ready(out)

    # Reference: XLA conv with the flipped-weight equivalence + sigmoid.
    w_eq = jnp.transpose(wt[:, :, ::-1, ::-1], (2, 3, 0, 1))    # (K, K, Cin, Cout)
    ref = jax.lax.conv_general_dilated(
        jnp.transpose(x, (0, 2, 3, 1)), w_eq,
        window_strides=(1, 1), padding=((1, 1), (1, 1)),
        dimension_numbers=("NHWC", "HWIO", "NHWC"),
        precision=jax.lax.Precision.HIGHEST)
    ref = jax.nn.sigmoid(ref + bias.reshape(1, 1, 1, C_out))
    ref = jnp.transpose(ref, (0, 3, 1, 2))

    assert out.shape == (N, C_out, H, W)
    max_err = float(jnp.max(jnp.abs(out - ref)))
    assert jnp.allclose(out, ref, atol=2e-3, rtol=2e-3), f"max_err={max_err}"

    print("KERNEL_OK")
</pallas_src>

<mosaic_0001>
module attributes {stable_mosaic.version = 11 : i64} {
  func.func @kernel(%arg0: i32, %arg1: memref<1x4x290xf32, #tpu.memory_space<vmem>>, %arg2: memref<3x36xf32, #tpu.memory_space<vmem>>, %arg3: memref<3x1xf32, #tpu.memory_space<vmem>>, %arg4: memref<1x3x256xf32, #tpu.memory_space<vmem>>) attributes {dimension_semantics = [#tpu.dimension_semantics<parallel>], iteration_bounds = array<i64: 2>, scalar_prefetch = 0 : i64, scratch_operands = 0 : i64, tpu.core_type = #tpu.core_type<tc>, window_params = [{transform_indices = @transform_0, window_bounds = array<i64: 1, 4, 290>}, {pipeline_mode = #tpu.pipeline_mode<synchronous>, transform_indices = @transform_1, window_bounds = array<i64: 3, 36>}, {pipeline_mode = #tpu.pipeline_mode<synchronous>, transform_indices = @transform_2, window_bounds = array<i64: 3, 1>}, {transform_indices = @transform_3, window_bounds = array<i64: 1, 3, 256>}]} {
    %c0 = arith.constant 0 : index
    %c0_0 = arith.constant 0 : index
    %c0_1 = arith.constant 0 : index
    %0 = vector.load %arg1[%c0, %c0_0, %c0_1] : memref<1x4x290xf32, #tpu.memory_space<vmem>>, vector<1x4x290xf32>
    %1 = vector.shape_cast %0 : vector<1x4x290xf32> to vector<4x290xf32>
    %2 = tpu.iota {dimensions = array<i32: 1>} : vector<4x256xi32>
    %c16_i32 = arith.constant 16 : i32
    %c0_i32 = arith.constant 0 : i32
    %3 = arith.cmpi eq, %c16_i32, %c0_i32 : i32
    %c1_i32 = arith.constant 1 : i32
    %4 = arith.select %3, %c1_i32, %c16_i32 : i32
    %5 = vector.broadcast %4 : i32 to vector<4x256xi32>
    %6 = arith.remsi %2, %5 : vector<4x256xi32>
    %c0_i32_2 = arith.constant 0 : i32
    %7 = vector.broadcast %c0_i32_2 : i32 to vector<4x256xi32>
    %8 = arith.cmpi ne, %6, %7 : vector<4x256xi32>
    %c0_i32_3 = arith.constant 0 : i32
    %9 = vector.broadcast %c0_i32_3 : i32 to vector<4x256xi32>
    %10 = arith.cmpi slt, %6, %9 : vector<4x256xi32>
    %c0_i32_4 = arith.constant 0 : i32
    %11 = arith.cmpi slt, %4, %c0_i32_4 : i32
    %12 = vector.broadcast %11 : i1 to vector<4x256xi1>
    %13 = vector.broadcast %12 : vector<4x256xi1> to vector<4x256xi1>
    %14 = arith.xori %10, %13 : vector<4x256xi1>
    %15 = arith.andi %14, %8 : vector<4x256xi1>
    %16 = vector.broadcast %4 : i32 to vector<4x256xi32>
    %17 = arith.addi %6, %16 : vector<4x256xi32>
    %18 = arith.select %15, %17, %6 : vector<4x256xi1>, vector<4x256xi32>
    %19 = vector.extract_strided_slice %1 {offsets = [0, 0], sizes = [4, 256], strides = [1, 1]} : vector<4x290xf32> to vector<4x256xf32>
    %c1_i32_5 = arith.constant 1 : i32
    %20 = vector.broadcast %c1_i32_5 : i32 to vector<4x256xi32>
    %21 = arith.cmpi sge, %18, %20 : vector<4x256xi32>
    %cst = arith.constant 0.000000e+00 : f32
    %22 = vector.broadcast %cst : f32 to vector<4x256xf32>
    %23 = arith.select %21, %19, %22 : vector<4x256xi1>, vector<4x256xf32>
    %24 = vector.extract_strided_slice %1 {offsets = [0, 1], sizes = [4, 256], strides = [1, 1]} : vector<4x290xf32> to vector<4x256xf32>
    %25 = vector.extract_strided_slice %1 {offsets = [0, 2], sizes = [4, 256], strides = [1, 1]} : vector<4x290xf32> to vector<4x256xf32>
    %c14_i32 = arith.constant 14 : i32
    %26 = vector.broadcast %c14_i32 : i32 to vector<4x256xi32>
    %27 = arith.cmpi sle, %18, %26 : vector<4x256xi32>
    %cst_6 = arith.constant 0.000000e+00 : f32
    %28 = vector.broadcast %cst_6 : f32 to vector<4x256xf32>
    %29 = arith.select %27, %25, %28 : vector<4x256xi1>, vector<4x256xf32>
    %30 = vector.extract_strided_slice %1 {offsets = [0, 16], sizes = [4, 256], strides = [1, 1]} : vector<4x290xf32> to vector<4x256xf32>
    %c1_i32_7 = arith.constant 1 : i32
    %31 = vector.broadcast %c1_i32_7 : i32 to vector<4x256xi32>
    %32 = arith.cmpi sge, %18, %31 : vector<4x256xi32>
    %cst_8 = arith.constant 0.000000e+00 : f32
    %33 = vector.broadcast %cst_8 : f32 to vector<4x256xf32>
    %34 = arith.select %32, %30, %33 : vector<4x256xi1>, vector<4x256xf32>
    %35 = vector.extract_strided_slice %1 {offsets = [0, 17], sizes = [4, 256], strides = [1, 1]} : vector<4x290xf32> to vector<4x256xf32>
    %36 = vector.extract_strided_slice %1 {offsets = [0, 18], sizes = [4, 256], strides = [1, 1]} : vector<4x290xf32> to vector<4x256xf32>
    %c14_i32_9 = arith.constant 14 : i32
    %37 = vector.broadcast %c14_i32_9 : i32 to vector<4x256xi32>
    %38 = arith.cmpi sle, %18, %37 : vector<4x256xi32>
    %cst_10 = arith.constant 0.000000e+00 : f32
    %39 = vector.broadcast %cst_10 : f32 to vector<4x256xf32>
    %40 = arith.select %38, %36, %39 : vector<4x256xi1>, vector<4x256xf32>
    %41 = vector.extract_strided_slice %1 {offsets = [0, 32], sizes = [4, 256], strides = [1, 1]} : vector<4x290xf32> to vector<4x256xf32>
    %c1_i32_11 = arith.constant 1 : i32
    %42 = vector.broadcast %c1_i32_11 : i32 to vector<4x256xi32>
    %43 = arith.cmpi sge, %18, %42 : vector<4x256xi32>
    %cst_12 = arith.constant 0.000000e+00 : f32
    %44 = vector.broadcast %cst_12 : f32 to vector<4x256xf32>
    %45 = arith.select %43, %41, %44 : vector<4x256xi1>, vector<4x256xf32>
    %46 = vector.extract_strided_slice %1 {offsets = [0, 33], sizes = [4, 256], strides = [1, 1]} : vector<4x290xf32> to vector<4x256xf32>
    %47 = vector.extract_strided_slice %1 {offsets = [0, 34], sizes = [4, 256], strides = [1, 1]} : vector<4x290xf32> to vector<4x256xf32>
    %c14_i32_13 = arith.constant 14 : i32
    %48 = vector.broadcast %c14_i32_13 : i32 to vector<4x256xi32>
    %49 = arith.cmpi sle, %18, %48 : vector<4x256xi32>
    %cst_14 = arith.constant 0.000000e+00 : f32
    %50 = vector.broadcast %cst_14 : f32 to vector<4x256xf32>
    %51 = arith.select %49, %47, %50 : vector<4x256xi1>, vector<4x256xf32>
    %52 = tpu.concatenate %23, %24, %29, %34, %35, %40, %45, %46, %51 in 0 : vector<4x256xf32>, vector<4x256xf32>, vector<4x256xf32>, vector<4x256xf32>, vector<4x256xf32>, vector<4x256xf32>, vector<4x256xf32>, vector<4x256xf32>, vector<4x256xf32> -> vector<36x256xf32>
    %c0_15 = arith.constant 0 : index
    %c0_16 = arith.constant 0 : index
    %53 = vector.load %arg2[%c0_15, %c0_16] : memref<3x36xf32, #tpu.memory_space<vmem>>, vector<3x36xf32>
    %cst_17 = arith.constant dense<0.000000e+00> : vector<3x256xf32>
    %54 = tpu.matmul %53, %52, %cst_17 {dimension_numbers = #tpu.dot_dimension_numbers<[1], [0], [0], [1], [0, 0, 1, 1], [], []>} : vector<3x36xf32>, vector<36x256xf32>, vector<3x256xf32> -> vector<3x256xf32>
    %c0_18 = arith.constant 0 : index
    %c0_19 = arith.constant 0 : index
    %55 = vector.load %arg3[%c0_18, %c0_19] : memref<3x1xf32, #tpu.memory_space<vmem>>, vector<3x1xf32>
    %56 = vector.broadcast %55 : vector<3x1xf32> to vector<3x256xf32>
    %57 = arith.addf %54, %56 : vector<3x256xf32>
    %cst_20 = arith.constant 0.000000e+00 : f32
    %58 = vector.broadcast %cst_20 : f32 to vector<3x256xf32>
    %59 = arith.subf %58, %57 : vector<3x256xf32>
    %60 = math.exp %59 : vector<3x256xf32>
    %cst_21 = arith.constant 1.000000e+00 : f32
    %61 = vector.broadcast %cst_21 : f32 to vector<3x256xf32>
    %62 = arith.addf %61, %60 : vector<3x256xf32>
    %63 = tpu.reciprocal %62 {approx = true} : vector<3x256xf32> -> vector<3x256xf32>
    %c0_22 = arith.constant 0 : index
    %c0_23 = arith.constant 0 : index
    %c0_24 = arith.constant 0 : index
    %64 = vector.load %arg4[%c0_22, %c0_23, %c0_24] : memref<1x3x256xf32, #tpu.memory_space<vmem>>, vector<1x3x256xf32>
    %65 = vector.shape_cast %64 : vector<1x3x256xf32> to vector<3x256xf32>
    %66 = vector.shape_cast %63 : vector<3x256xf32> to vector<1x3x256xf32>
    tpu.vector_store %arg4[%c0_22, %c0_23, %c0_24], %66 {strides = array<i32>} : memref<1x3x256xf32, #tpu.memory_space<vmem>>, vector<1x3x256xf32>,
    return
  }
  func.func @transform_0(%arg0: i32) -> (i32, i32, i32) {
    %c0_i32 = arith.constant 0 : i32
    %c0_i32_0 = arith.constant 0 : i32
    %c0_i32_1 = arith.constant 0 : i32
    return %arg0, %c0_i32, %c0_i32_0 : i32, i32, i32
  }
  func.func @transform_1(%arg0: i32) -> (i32, i32) {
    %c0_i32 = arith.constant 0 : i32
    %c0_i32_0 = arith.constant 0 : i32
    %c0_i32_1 = arith.constant 0 : i32
    return %c0_i32, %c0_i32_0 : i32, i32
  }
  func.func @transform_2(%arg0: i32) -> (i32, i32) {
    %c0_i32 = arith.constant 0 : i32
    %c0_i32_0 = arith.constant 0 : i32
    %c0_i32_1 = arith.constant 0 : i32
    return %c0_i32, %c0_i32_0 : i32, i32
  }
  func.func @transform_3(%arg0: i32) -> (i32, i32, i32) {
    %c0_i32 = arith.constant 0 : i32
    %c0_i32_0 = arith.constant 0 : i32
    %c0_i32_1 = arith.constant 0 : i32
    return %arg0, %c0_i32, %c0_i32_0 : i32, i32, i32
  }
}

</mosaic_0001>

<llo_original>
// kernel: outconv_forward.1
$region0: #{outconv_forward.1}
  #allocation0 [shape = 'u32[]', space=smem, size = 0x4, offset = 0x4, fixed_abs, tag = 'smem constant byte address 0x4 - core index']
  #allocation1 [shape = 'u32[144,128]{1,0:T(1,128)}', space=vmem, size = 0x12000, scoped, tag = 'internal scratch']
  %s0 = inlined_call_operand.vmem [shape: f32[2,4,290], index: 0, kind: input, shape index: {}]
  %s1 = inlined_call_operand.vmem [shape: f32[3,36], index: 1, kind: input, shape index: {}]
  %s2 = inlined_call_operand.vmem [shape: f32[3,1], index: 2, kind: input, shape index: {}]
  %s3 = inlined_call_operand.vmem [shape: f32[2,3,256], index: 3, kind: output, shape index: {}]
  %s4 = sld [smem:[#allocation0]]
  $region45: #{outconv_forward.1} parent=0
    _
  %s6 = ssub.s32 1, %s4
  %s7 = scalar_select 0, %s6, %s4
  loop: start=0, step=1, limit=4
  $region2: #{outconv_forward.1} parent=0 // loop_pre_header
    _
  $region3: #{outconv_forward.1} parent=0 // loop_header
    %s9 = sphi 0, %s13
    %p10 = scmp.ge.s32.totalorder %s9, 4
    %s19 = sphi 0, %s21
    %s22 = sphi 0, %s19
    %s23 = sphi 0, %s22
    %s39 = sphi 0, %s23
    %s43 = sphi 0, %s43
    %s45 = sphi 0, %s43
    %s46 = sphi 0, %s45
    %s60 = sphi 0, %s46
    %s64 = sphi 0, %s64
    %s66 = sphi 0, %s64
    %s67 = sphi 0, %s66
    %s81 = sphi 0, %s67
    %s87 = sphi 0, %s89
    %s90 = sphi 0, %s87
    %s91 = sphi 0, %s90
    %s107 = sphi 0, %s91
  $region4: #{outconv_forward.1} parent=0 // loop_header_branch
    %12 = sbr.rel (%p10) target = $region8
  $region5: #{outconv_forward.1} parent=0 // loop_body
    %s14 = ssub.s32 %s9, 1
    %s15 = ssub.s32 %s9, 2
    %s16 = sadd.s32 %s9, 1
    %s17 = ssub.s32 %s9, %s16
    %p18 = scmp.eq.s32.totalorder %s17, 0
    %s20 = sadd.s32 %s19, 1
    %s21 = scalar_select %p18, %s19, %s20
    %p24 = pneg %p18
    %p25 = scmp.eq.s32.totalorder %s9, 1
    %p26 = por %p24, %p25
    %p27 = scmp.ne.s32.totalorder %s19, %s22
    %p28 = scmp.eq.s32.totalorder %s9, 0
    %p29 = por %p27, %p28
    %p30 = scmp.ne.s32.totalorder %s19, %s22
    %p31 = scmp.eq.s32.totalorder %s14, 1
    %p32 = por %p30, %p31
    %p33 = scmp.ne.s32.totalorder %s22, %s23
    %p34 = scmp.eq.s32.totalorder %s14, 0
    %p35 = por %p33, %p34
    %p36 = scmp.ne.s32.totalorder %s22, %s23
    %p37 = scmp.eq.s32.totalorder %s15, 1
    %p38 = por %p36, %p37
    %p40 = scmp.ne.s32.totalorder %s23, %s39
    %p41 = scmp.eq.s32.totalorder %s15, 0
    %p42 = por %p40, %p41
    %s44 = sadd.s32 %s43, 1
    %p47 = scmp.eq.s32.totalorder %s9, 1
    %p48 = scmp.ne.s32.totalorder %s43, %s45
    %p49 = scmp.eq.s32.totalorder %s9, 0
    %p50 = por %p48, %p49
    %p51 = scmp.ne.s32.totalorder %s43, %s45
    %p52 = scmp.eq.s32.totalorder %s14, 1
    %p53 = por %p51, %p52
    %p54 = scmp.ne.s32.totalorder %s45, %s46
    %p55 = scmp.eq.s32.totalorder %s14, 0
    %p56 = por %p54, %p55
    %p57 = scmp.ne.s32.totalorder %s45, %s46
    %p58 = scmp.eq.s32.totalorder %s15, 1
    %p59 = por %p57, %p58
    %p61 = scmp.ne.s32.totalorder %s46, %s60
    %p62 = scmp.eq.s32.totalorder %s15, 0
    %p63 = por %p61, %p62
    %s65 = sadd.s32 %s64, 1
    %p68 = scmp.eq.s32.totalorder %s9, 1
    %p69 = scmp.ne.s32.totalorder %s64, %s66
    %p70 = scmp.eq.s32.totalorder %s9, 0
    %p71 = por %p69, %p70
    %p72 = scmp.ne.s32.totalorder %s64, %s66
    %p73 = scmp.eq.s32.totalorder %s14, 1
    %p74 = por %p72, %p73
    %p75 = scmp.ne.s32.totalorder %s66, %s67
    %p76 = scmp.eq.s32.totalorder %s14, 0
    %p77 = por %p75, %p76
    %p78 = scmp.ne.s32.totalorder %s66, %s67
    %p79 = scmp.eq.s32.totalorder %s15, 1
    %p80 = por %p78, %p79
    %p82 = scmp.ne.s32.totalorder %s67, %s81
    %p83 = scmp.eq.s32.totalorder %s15, 0
    %p84 = por %p82, %p83
    %s85 = ssub.s32 %s9, %s16
    %p86 = scmp.eq.s32.totalorder %s85, 0
    %s88 = sadd.s32 %s87, 1
    %s89 = scalar_select %p86, %s87, %s88
    %p92 = pneg %p86
    %p93 = scmp.eq.s32.totalorder %s9, 1
    %p94 = por %p92, %p93
    %p95 = scmp.ne.s32.totalorder %s87, %s90
    %p96 = scmp.eq.s32.totalorder %s9, 0
    %p97 = por %p95, %p96
    %p98 = scmp.ne.s32.totalorder %s87, %s90
    %p99 = scmp.eq.s32.totalorder %s14, 1
    %p100 = por %p98, %p99
    %p101 = scmp.ne.s32.totalorder %s90, %s91
    %p102 = scmp.eq.s32.totalorder %s14, 0
    %p103 = por %p101, %p102
    %p104 = scmp.ne.s32.totalorder %s90, %s91
    %p105 = scmp.eq.s32.totalorder %s15, 1
    %p106 = por %p104, %p105
    %p108 = scmp.ne.s32.totalorder %s91, %s107
    %p109 = scmp.eq.s32.totalorder %s15, 0
    %p110 = por %p108, %p109
    %p111 = scmp.le.s32.totalorder 1, %s9
    %p112 = scmp.lt.s32.totalorder %s9, 3
    %p113 = pnand %p111, %p112
    %p114 = pneg %p113
    // Predicated region
    $region9: #{outconv_forward.1} parent=5 // pred_check
      _
    $region10: #{outconv_forward.1} parent=5 // pred_check_branch
      %116 = sbr.rel (%p113) target = $region12
    $region11: #{outconv_forward.1} parent=5 // pred_region
      %s117 = ssub.s32 %s9, 1
      // Predicated region
      $region13: #{outconv_forward.1} parent=11 // pred_check
        %p118 = pneg %p56
      $region14: #{outconv_forward.1} parent=11 // pred_check_branch
        %120 = sbr.rel (%p118) target = $region16
      $region15: #{outconv_forward.1} parent=11 // pred_region
        _
      $region16: #{outconv_forward.1} parent=11 // pred_fallthru
        _
      // Predicated region
      $region17: #{outconv_forward.1} parent=11 // pred_check
        %p121 = pneg %p77
      $region18: #{outconv_forward.1} parent=11 // pred_check_branch
        %123 = sbr.rel (%p121) target = $region20
      $region19: #{outconv_forward.1} parent=11 // pred_region
        _
      $region20: #{outconv_forward.1} parent=11 // pred_fallthru
        _
    $region12: #{outconv_forward.1} parent=5 // pred_fallthru
      _
    %p124 = scmp.lt.s32.totalorder %s9, 2
    // Predicated region
    $region21: #{outconv_forward.1} parent=5 // pred_check
      %p125 = pneg %p124
    $region22: #{outconv_forward.1} parent=5 // pred_check_branch
      %127 = sbr.rel (%p125) target = $region24
    $region23: #{outconv_forward.1} parent=5 // pred_region
      // Predicated region
      $region25: #{outconv_forward.1} parent=23 // pred_check
        %p128 = pneg %p29
      $region26: #{outconv_forward.1} parent=23 // pred_check_branch
        %130 = sbr.rel (%p128) target = $region28
      $region27: #{outconv_forward.1} parent=23 // pred_region
        %p131 = scmp.lt.s32.totalorder %s9, 1
        %s132 = scalar_select %p131, %s9, 1
        %s133 = smul.addr %s132, 3
        %s134 = smul.addr %s133, 4
        %s135 = scalar_lea.vmem %s0, %s134
      $region28: #{outconv_forward.1} parent=23 // pred_fallthru
        _
    $region24: #{outconv_forward.1} parent=5 // pred_fallthru
      _
    %p136 = scmp.le.s32.totalorder 1, %s9
    %p137 = scmp.lt.s32.totalorder %s9, 3
    %p138 = pnand %p136, %p137
    %p139 = pneg %p138
    // Predicated region
    $region29: #{outconv_forward.1} parent=5 // pred_check
      _
    $region30: #{outconv_forward.1} parent=5 // pred_check_branch
      %141 = sbr.rel (%p138) target = $region32
    $region31: #{outconv_forward.1} parent=5 // pred_region
      %s142 = ssub.s32 %s9, 1
      %p143 = scmp.lt.s32.totalorder %s14, 1
      %s144 = scalar_select %p143, %s14, 1
      %s145 = smul.addr %s144, 3
      %s146 = smul.addr %s145, 4
      %s147 = scalar_lea.vmem %s0, %s146
      %p148 = pneg %p35
      %p149 = pneg %p32
      %p150 = pneg %p56
      %p151 = pneg %p53
      %p152 = pneg %p77
      %p153 = pneg %p74
      %p154 = pneg %p103
      %p155 = pneg %p100
      %p156 = scmp.lt.s32.totalorder %s14, 1
      %s157 = scalar_select %p156, %s14, 1
      %s158 = smul.addr %s157, 2
      %s159 = smul.addr %s158, 4
      %s160 = scalar_lea.vmem %s3, %s159
      %p161 = scmp.lt.s32.totalorder %s14, 1
      %s162 = scalar_select %p161, %s14, 1
      %s163 = smul.addr %s162, 3
      %s164 = smul.addr %s163, 4
      %s165 = scalar_lea.vmem %s0, %s164
      %p166 = scmp.lt.s32.totalorder %s14, 1
      %s167 = scalar_select %p166, %s14, 1
      %s168 = smul.addr %s167, 2
      %s169 = smul.addr %s168, 4
      %s170 = scalar_lea.vmem %s3, %s169
      %v171 = vld [vmem:[%s165] sm:$0xff]
      %v172 = vld [vmem:[%s165 + $0x8] sm:$0xf]
      %v173 = vlaneseq
      %v174 = vand.u32 %v173, 127
      %v175 = vadd.s32 %v174, 128
      %vm176 = vcmp.lt.s32.totalorder %v174, 0
      %v177 = vsub.s32 0, %v174
      %v178 = vsel %vm176, %v177, %v174
      %v179 = vshrl.u32 %v178, 4
      %v180 = vand.u32 %v178, 15
      %v181 = vsub.s32 0, %v180
      %v182 = vsel %vm176, %v181, %v180
      %vm183 = vcmp.lt.s32.totalorder %v175, 0
      %v184 = vsub.s32 0, %v175
      %v185 = vsel %vm183, %v184, %v175
      %v186 = vshrl.u32 %v185, 4
      %v187 = vand.u32 %v185, 15
      %v188 = vsub.s32 0, %v187
      %v189 = vsel %vm183, %v188, %v187
      %vm190 = vcmp.ne.s32.totalorder %v182, 0
      %vm191 = vcmp.ne.s32.totalorder %v189, 0
      %vm192 = vcmp.lt.s32.totalorder %v182, 0
      %vm193 = vcmp.lt.s32.totalorder %v189, 0
      %vm194 = vmand %vm192, %vm190
      %vm195 = vmand %vm193, %vm191
      %v196 = vadd.s32 %v182, 16
      %v197 = vadd.s32 %v189, 16
      %v198 = vsel %vm194, %v196, %v182
      %v199 = vsel %vm195, %v197, %v189
      %vm200 = vcmp.ge.s32.totalorder %v198, 1
      %vm201 = vcmp.ge.s32.totalorder %v199, 1
      %v203 = vcombine.high %v171, %v171
      %v205 = vsel %vm200, %v171, 0.0
      %v206 = vsel %vm201, %v203, 0.0
      %vm207 = vcmp.le.s32.totalorder %v198, 14
      %vm208 = vcmp.le.s32.totalorder %v199, 14
      %210 = vrot.lane.b32.xlu0 %v171, 126
      %v211 = vpop.permute.xlu0 %210
      %212 = vrot.lane.b32.xlu0 %v203, 126
      %v213 = vpop.permute.xlu0 %212
      %214 = vrot.lane.b32.xlu0 %v172, 126
      %v215 = vpop.permute.xlu0 %214
      %vm216 = vcmask 1031168
      %v217 = vsel %vm216, %v211, %v213
      %v218 = vsel %vm216, %v213, %v215
      %v221 = vsel %vm207, %v217, 0.0
      %v222 = vsel %vm208, %v218, 0.0
      %223 = vrot.lane.b32.xlu0 %v171, 112
      %v224 = vpop.permute.xlu0 %223
      %225 = vrot.lane.b32.xlu0 %v203, 112
      %v226 = vpop.permute.xlu0 %225
      %227 = vrot.lane.b32.xlu0 %v172, 112
      %v228 = vpop.permute.xlu0 %227
      %vm229 = vcmask 916480
      %v230 = vsel %vm229, %v224, %v226
      %v231 = vsel %vm229, %v226, %v228
      %v234 = vsel %vm200, %v230, 0.0
      %v235 = vsel %vm201, %v231, 0.0
      %236 = vrot.lane.b32.xlu0 %v171, 110
      %v237 = vpop.permute.xlu0 %236
      %238 = vrot.lane.b32.xlu0 %v203, 110
      %v239 = vpop.permute.xlu0 %238
      %240 = vrot.lane.b32.xlu0 %v172, 110
      %v241 = vpop.permute.xlu0 %240
      %vm242 = vcmask 900096
      %v243 = vsel %vm242, %v237, %v239
      %v244 = vsel %vm242, %v239, %v241
      %v247 = vsel %vm207, %v243, 0.0
      %v248 = vsel %vm208, %v244, 0.0
      %249 = vrot.lane.b32.xlu0 %v171, 96
      %v250 = vpop.permute.xlu0 %249
      %251 = vrot.lane.b32.xlu0 %v203, 96
      %v252 = vpop.permute.xlu0 %251
      %253 = vrot.lane.b32.xlu0 %v172, 96
      %v254 = vpop.permute.xlu0 %253
      %vm255 = vcmask 785408
      %v256 = vsel %vm255, %v250, %v252
      %v257 = vsel %vm255, %v252, %v254
      %v260 = vsel %vm200, %v256, 0.0
      %v261 = vsel %vm201, %v257, 0.0
      %262 = vrot.lane.b32.xlu0 %v171, 94
      %v263 = vpop.permute.xlu0 %262
      %264 = vrot.lane.b32.xlu0 %v203, 94
      %v265 = vpop.permute.xlu0 %264
      %266 = vrot.lane.b32.xlu0 %v172, 94
      %v267 = vpop.permute.xlu0 %266
      %vm268 = vcmask 769024
      %v269 = vsel %vm268, %v263, %v265
      %v270 = vsel %vm268, %v265, %v267
      %v273 = vsel %vm207, %v269, 0.0
      %v274 = vsel %vm208, %v270, 0.0
      %v275 = vcombine.low %v171, %v171
      %v276 = vcombine.low %v172, %v172
      %277 = vrot.lane.b32.xlu0 %v275, 127
      %v278 = vpop.permute.xlu0 %277
      %279 = vrot.lane.b32.xlu0 %v171, 127
      %v280 = vpop.permute.xlu0 %279
      %281 = vrot.lane.b32.xlu0 %v276, 127
      %v282 = vpop.permute.xlu0 %281
      %vm283 = vcmask 1039360
      %v284 = vsel %vm283, %v278, %v280
      %v285 = vsel %vm283, %v280, %v282
      %v290 = vrot.slane %v234, 4
      %v291 = vrot.slane %v235, 4
      %294 = vrot.lane.b32.xlu0 %v171, 111
      %v295 = vpop.permute.xlu0 %294
      %296 = vrot.lane.b32.xlu0 %v203, 111
      %v297 = vpop.permute.xlu0 %296
      %298 = vrot.lane.b32.xlu0 %v172, 111
      %v299 = vpop.permute.xlu0 %298
      %vm300 = vcmask 908288
      %v301 = vsel %vm300, %v295, %v297
      %v302 = vsel %vm300, %v297, %v299
      %v307 = vrot.slane %v247, 4
      %v308 = vrot.slane %v248, 4
      %311 = vrot.lane.b32.xlu0 %v275, 95
      %v312 = vpop.permute.xlu0 %311
      %313 = vrot.lane.b32.xlu0 %v171, 95
      %v314 = vpop.permute.xlu0 %313
      %315 = vrot.lane.b32.xlu0 %v276, 95
      %v316 = vpop.permute.xlu0 %315
      %vm317 = vcmask 777216
      %v318 = vsel %vm317, %v312, %v314
      %v319 = vsel %vm317, %v314, %v316
      %vm322 = vcmask 1043456
      %v323 = vsel %vm322, %v205, %v284
      %v324 = vsel %vm322, %v206, %v285
      %v325 = vsel %vm322, %v221, %v290
      %v326 = vsel %vm322, %v222, %v291
      %v327 = vsel %vm322, %v301, %v307
      %v328 = vsel %vm322, %v302, %v308
      %v329 = vsel %vm322, %v260, %v318
      %v330 = vsel %vm322, %v261, %v319
      %v331 = vld [vmem:[%s1] sm:$0x7]
      %v332 = vld [vmem:[%s2] sm:$0x7]
      %334 = vset.pattern.permute.xlu0 0
      %335 = vperm.xlu0 %334, %v332
      %v336 = vpop.permute.xlu0 %335
      %vm338 = vcmask 293888
      %v340 = vsel %vm338, %v331, 0
      %v343 = vsel %vm322, %v273, 0
      %v346 = vsel %vm322, %v274, 0
      %348 = vmatprep.subr.mxu0 0.0
      %349 = vmatpush1.msra.mxu0 0.0
      %350 = vmatprep.subr.mxu0 0.0
      %351 = vmatpush1.msra.mxu0 0.0
      %352 = vmatprep.subr.mxu0 0.0
      %353 = vmatpush1.msra.mxu0 0.0
      %354 = vmatprep.subr.mxu0 0.0
      %355 = vmatpush1.msra.mxu0 0.0
      %356 = vmatprep.subr.mxu0 0.0
      %357 = vmatpush1.msra.mxu0 0.0
      %358 = vmatprep.subr.mxu0 0.0
      %359 = vmatpush1.msra.mxu0 0.0
      %360 = vmatprep.subr.mxu0 0.0
      %361 = vmatpush1.msra.mxu0 0.0
      %362 = vmatprep.subr.mxu0 0.0
      %363 = vmatpush1.msra.mxu0 0.0
      %364 = vmatprep.subr.mxu0 0.0
      %365 = vmatpush1.msra.mxu0 0.0
      %366 = vmatprep.subr.mxu0 0.0
      %367 = vmatpush1.msra.mxu0 0.0
      %368 = vmatprep.subr.mxu0 0.0
      %369 = vmatpush1.msra.mxu0 0.0
      %370 = vmatprep.subr.mxu0 %v346
      %371 = vmatpush1.msra.mxu0 %v343
      %372 = vmatprep.subr.mxu0 %v330
      %373 = vmatpush1.msra.mxu0 %v329
      %374 = vmatprep.subr.mxu0 %v328
      %375 = vmatpush1.msra.mxu0 %v327
      %376 = vmatprep.subr.mxu0 %v326
      %377 = vmatpush1.msra.mxu0 %v325
      %378 = vmatprep.subr.mxu0 %v324
      %379 = vmatpush1.msra.mxu0 %v323
      %380 = vmatprep.subr.mxu0 0.0
      %381 = vmatpush2.msra.mxu0 0.0
      %382 = vmatprep.subr.mxu0 0.0
      %383 = vmatpush2.msra.mxu0 0.0
      %384 = vmatprep.subr.mxu0 0.0
      %385 = vmatpush2.msra.mxu0 0.0
      %386 = vmatprep.subr.mxu0 0.0
      %387 = vmatpush2.msra.mxu0 0.0
      %388 = vmatprep.subr.mxu0 0.0
      %389 = vmatpush2.msra.mxu0 0.0
      %390 = vmatprep.subr.mxu0 0.0
      %391 = vmatpush2.msra.mxu0 0.0
      %392 = vmatprep.subr.mxu0 0.0
      %393 = vmatpush2.msra.mxu0 0.0
      %394 = vmatprep.subr.mxu0 0.0
      %395 = vmatpush2.msra.mxu0 0.0
      %396 = vmatprep.subr.mxu0 0.0
      %397 = vmatpush2.msra.mxu0 0.0
      %398 = vmatprep.subr.mxu0 0.0
      %399 = vmatpush2.msra.mxu0 0.0
      %400 = vmatprep.subr.mxu0 0.0
      %401 = vmatpush2.msra.mxu0 0.0
      %402 = vmatprep.subr.mxu0 0.0
      %403 = vmatpush2.msra.mxu0 0.0
      %404 = vmatprep.subr.mxu0 0.0
      %405 = vmatpush2.msra.mxu0 0.0
      %406 = vmatprep.subr.mxu0 0.0
      %407 = vmatpush2.msra.mxu0 0.0
      %408 = vmatprep.subr.mxu0 0.0
      %409 = vmatpush2.msra.mxu0 0.0
      %410 = vmatprep.subr.mxu0 0.0
      %411 = vmatpush2.msra.mxu0 0.0
      %412 = vmatprep.mubr.f32.mxu0 0.0
      %413 = vmatmul.mubr.f32.gmra.mxu0 %v340
      %v414 = vpop.f32.mrf.mxu0
      %v415 = vadd.f32 %v336, %v414
      %v416 = vpop.f32.mrf.mxu0
      %v417 = vadd.f32 %v336, %v416
      %418 = vdwg.mxu0
      %v419 = vsub.f32 0.0, %v415
      %v420 = vsub.f32 0.0, %v417
      %v421 = vmul.f32 %v419, 1.442695
      %v422 = vpow.pop %v421
      %v423 = vmul.f32 %v420, 1.442695
      %v424 = vpow.pop %v423
      %v425 = vadd.f32 %v422, 1.0
      %v426 = vadd.f32 %v424, 1.0
      %v427 = vrcp.pop %v425
      %v428 = vrcp.pop %v426
      %v431 = vcombine.low %v427, %v428
      %433 = vst [vmem:[%s170] sm:$0x77] %v431
      %p434 = scmp.lt.s32.totalorder %s14, 1
      %s435 = scalar_select %p434, %s14, 1
      %s436 = smul.addr %s435, 2
      %s437 = smul.addr %s436, 4
      %s438 = scalar_lea.vmem %s3, %s437
      // Predicated region
      $region33: #{outconv_forward.1} parent=31 // pred_check
        %p439 = pneg %p100
      $region34: #{outconv_forward.1} parent=31 // pred_check_branch
        %441 = sbr.rel (%p439) target = $region36
      $region35: #{outconv_forward.1} parent=31 // pred_region
        _
      $region36: #{outconv_forward.1} parent=31 // pred_fallthru
        _
    $region32: #{outconv_forward.1} parent=5 // pred_fallthru
      _
    %p442 = scmp.le.s32.totalorder 2, %s9
    // Predicated region
    $region37: #{outconv_forward.1} parent=5 // pred_check
      %p443 = pneg %p442
    $region38: #{outconv_forward.1} parent=5 // pred_check_branch
      %445 = sbr.rel (%p443) target = $region40
    $region39: #{outconv_forward.1} parent=5 // pred_region
      %s446 = ssub.s32 %s9, 2
      // Predicated region
      $region41: #{outconv_forward.1} parent=39 // pred_check
        %p447 = pneg %p106
      $region42: #{outconv_forward.1} parent=39 // pred_check_branch
        %449 = sbr.rel (%p447) target = $region44
      $region43: #{outconv_forward.1} parent=39 // pred_region
        %p450 = scmp.lt.s32.totalorder %s15, 1
        %s451 = scalar_select %p450, %s15, 1
        %s452 = smul.addr %s451, 2
        %s453 = smul.addr %s452, 4
        %s454 = scalar_lea.vmem %s3, %s453
      $region44: #{outconv_forward.1} parent=39 // pred_fallthru
        _
    $region40: #{outconv_forward.1} parent=5 // pred_fallthru
      _
  $region6: #{outconv_forward.1} parent=0 // loop_footer
    %s13 = sadd.s32 1, %s9
  $region7: #{outconv_forward.1} parent=0 // loop_footer_branch
    %8 = sbr.rel target = $region3
  $region8: #{outconv_forward.1} parent=0 // loop_exit
    _

</llo_original>
